<compile_context>
chip_gen: v7x
topology: tpu7x:2x2x1
jax: 0.10.0
libtpu: 0.0.40
codegen_flags: <defaults>
</compile_context>

<pallas_src>
import jax
import jax.numpy as jnp
from jax.experimental import pallas as pl
from jax.experimental.pallas import tpu as pltpu


def _round_up(n, m):
    return ((n + m - 1) // m) * m


def _cdiv(a, b):
    return (a + b - 1) // b


def _energy_kernel(x_ref, y_ref,
                   w1x_ref, w1y_ref, b1_ref,
                   w2_ref, b2_ref,
                   w3_ref, b3_ref,
                   w4t_ref, b4_ref,
                   o_ref):
    # Layer 1: concat fused as two matmuls against the split halves of W1 (f32 accumulate).
    h = (jnp.dot(x_ref[...], w1x_ref[...], preferred_element_type=jnp.float32)
         + jnp.dot(y_ref[...], w1y_ref[...], preferred_element_type=jnp.float32)
         + b1_ref[...])
    h = jnp.maximum(h, 0.0).astype(w2_ref.dtype)   # ReLU in f32, then match stream dtype

    h = jnp.dot(h, w2_ref[...], preferred_element_type=jnp.float32) + b2_ref[...]
    h = jnp.maximum(h, 0.0).astype(w3_ref.dtype)

    h = jnp.dot(h, w3_ref[...], preferred_element_type=jnp.float32) + b3_ref[...]
    h = jnp.maximum(h, 0.0)                        # keep f32 for the head

    # Head (H -> 1): VPU multiply + lane reduce. Batch stays on sublanes ->
    # (tile_b, 1) store, no sublane->lane relayout on the vex slot.
    e = jnp.sum(h * w4t_ref[...].astype(jnp.float32), axis=-1, keepdims=True)   # (tile_b, 1)
    o_ref[...] = (e + b4_ref[...]).astype(o_ref.dtype)


_MAX_TILE = 8192  # cap: keeps VMEM (incl. 128-lane-padded H=32 intermediates) well under 64 MiB


def energy_model_forward(x, y, params, *, tile_b=None, stream_bf16=True):
    """x: (B, input_size), y: (B, action_size) -> energy (B,) in float32."""
    B, input_size = x.shape
    By, action_size = y.shape
    assert B == By

    # --- Batch-tile selection -------------------------------------------------
    # Big tiles amortize the ~0.35 us per-grid-step overhead; tiles are sized from B
    # so ragged-tail padding stays small, and grid_b >= 2 for large B (v7x megacore).
    if tile_b is None:
        if B <= 1024:
            tile_b = _round_up(B, 8)                      # single block, <8 rows of padding
        else:
            n_blocks = max(2, _cdiv(B, _MAX_TILE))
            tile_b = min(_MAX_TILE, _round_up(_cdiv(B, n_blocks), 128))
    tile_b = _round_up(tile_b, 8)
    B_pad = _round_up(B, tile_b)
    grid_b = B_pad // tile_b

    # --- Weight / dtype preparation --------------------------------------------
    # Split W1 so the concat never touches HBM.
    w1x = params["w1"][:input_size]
    w1y = params["w1"][input_size:]

    stream_dtype = jnp.bfloat16 if stream_bf16 else jnp.float32
    xk = x.astype(stream_dtype)
    yk = y.astype(stream_dtype)
    w1x = w1x.astype(stream_dtype)
    w1y = w1y.astype(stream_dtype)
    w2 = params["w2"].astype(stream_dtype)
    w3 = params["w3"].astype(stream_dtype)
    w4t = params["w4"].T.astype(stream_dtype)            # (1, H) for the VPU reduce head
    b1 = params["b1"].astype(jnp.float32)                 # biases stay f32 (accumulator path)
    b2 = params["b2"].astype(jnp.float32)
    b3 = params["b3"].astype(jnp.float32)
    b4 = params["b4"].astype(jnp.float32)                 # (1, 1)

    if B_pad != B:                                         # ragged tail: zero-pad, slice later
        pad = B_pad - B
        xk = jnp.pad(xk, ((0, pad), (0, 0)))
        yk = jnp.pad(yk, ((0, pad), (0, 0)))

    def _resident(arr):
        # Small weight/bias: fully resident, same block index every grid step (no re-DMA).
        return pl.BlockSpec(arr.shape, lambda i: (0,) * arr.ndim)

    in_specs = [
        pl.BlockSpec((tile_b, input_size), lambda i: (i, 0)),    # x, tiled over batch
        pl.BlockSpec((tile_b, action_size), lambda i: (i, 0)),   # y, tiled over batch
        _resident(w1x), _resident(w1y), _resident(b1),
        _resident(w2), _resident(b2),
        _resident(w3), _resident(b3),
        _resident(w4t), _resident(b4),
    ]
    # Energy as a (tile_b, 1) column slab; last dim equals the full array extent.
    out_specs = pl.BlockSpec((tile_b, 1), lambda i: (i, 0))

    cp_kwargs = dict(dimension_semantics=("parallel",))   # batch axis sharded across TCs (v7x)
    if tile_b >= 2048:
        # Above v5e's 16 MiB / v6e-v7x's 32 MiB scoped defaults, under v7x's 64 MiB physical.
        cp_kwargs["vmem_limit_bytes"] = 56 * 1024 * 1024

    out = pl.pallas_call(
        _energy_kernel,
        out_shape=jax.ShapeDtypeStruct((B_pad, 1), jnp.float32),
        grid_spec=pltpu.PrefetchScalarGridSpec(
            num_scalar_prefetch=0,
            grid=(grid_b,),
            in_specs=in_specs,
            out_specs=out_specs,
        ),
        compiler_params=pltpu.CompilerParams(**cp_kwargs),
    )(xk, yk, w1x, w1y, b1, w2, b2, w3, b3, w4t, b4)

    return out[:B, 0]                                      # squeeze(-1) + drop padding


def init_params(key, input_size, action_size, hidden_size):
    """Deterministic synthetic init matching nn.Linear shapes.
    PyTorch Linear(in, out) has weight (out, in); stored here transposed as (in, out)."""
    dims_in = [input_size + action_size, hidden_size, hidden_size, hidden_size]
    dims_out = [hidden_size, hidden_size, hidden_size, 1]
    params = {}
    keys = jax.random.split(key, 8)
    for li, (din, dout) in enumerate(zip(dims_in, dims_out), start=1):
        bound = 1.0 / jnp.sqrt(jnp.float32(din))
        w = jax.random.uniform(keys[2 * (li - 1)], (din, dout),
                               minval=-bound, maxval=bound, dtype=jnp.float32)
        b = jax.random.uniform(keys[2 * (li - 1) + 1], (1, dout),
                               minval=-bound, maxval=bound, dtype=jnp.float32)
        params[f"w{li}"] = w
        params[f"b{li}"] = b
    return params


def reference_forward(x, y, params):
    """Plain-JAX reference for correctness check."""
    h = jnp.concatenate([x, y], axis=-1)
    h = jax.nn.relu(h @ params["w1"] + params["b1"])
    h = jax.nn.relu(h @ params["w2"] + params["b2"])
    h = jax.nn.relu(h @ params["w3"] + params["b3"])
    return (h @ params["w4"] + params["b4"])[:, 0]


if __name__ == "__main__":
    key = jax.random.PRNGKey(0)
    k_params, k_x, k_y, k_x2, k_y2 = jax.random.split(key, 5)

    input_size = 16
    action_size = 16
    hidden_size = 32
    params = init_params(k_params, input_size, action_size, hidden_size)

    # Small single-tile case (matches the toy module sizes) — tight f32 check.
    batch = 8
    x = jax.random.normal(k_x, (batch, input_size), dtype=jnp.float32)
    y = jax.random.normal(k_y, (batch, action_size), dtype=jnp.float32)
    ref = reference_forward(x, y, params)

    energy_f32 = jax.block_until_ready(
        energy_model_forward(x, y, params, stream_bf16=False))
    assert energy_f32.shape == (batch,)
    assert jnp.allclose(energy_f32, ref, atol=1e-5, rtol=1e-5), (energy_f32, ref)

    # Default path: bf16 streaming (halved HBM traffic), f32 accumulation.
    energy_bf16 = jax.block_until_ready(energy_model_forward(x, y, params))
    assert energy_bf16.shape == (batch,)
    assert jnp.allclose(energy_bf16, ref, atol=5e-2, rtol=5e-2)

    # Multi-block case: exercises the tiled grid, ragged-tail padding, (tile_b,1) stores.
    batch2 = 300
    x2 = jax.random.normal(k_x2, (batch2, input_size), dtype=jnp.float32)
    y2 = jax.random.normal(k_y2, (batch2, action_size), dtype=jnp.float32)
    energy2 = jax.block_until_ready(
        energy_model_forward(x2, y2, params, tile_b=128, stream_bf16=False))
    ref2 = reference_forward(x2, y2, params)
    assert energy2.shape == (batch2,)
    assert jnp.allclose(energy2, ref2, atol=1e-5, rtol=1e-5)

    print("KERNEL_OK")
</pallas_src>

<mosaic_0001>
module attributes {stable_mosaic.version = 11 : i64} {
  func.func @_energy_kernel(%arg0: i32, %arg1: memref<8x16xf32, #tpu.memory_space<vmem>>, %arg2: memref<8x16xf32, #tpu.memory_space<vmem>>, %arg3: memref<16x32xf32, #tpu.memory_space<vmem>>, %arg4: memref<16x32xf32, #tpu.memory_space<vmem>>, %arg5: memref<1x32xf32, #tpu.memory_space<vmem>>, %arg6: memref<32x32xf32, #tpu.memory_space<vmem>>, %arg7: memref<1x32xf32, #tpu.memory_space<vmem>>, %arg8: memref<32x32xf32, #tpu.memory_space<vmem>>, %arg9: memref<1x32xf32, #tpu.memory_space<vmem>>, %arg10: memref<1x32xf32, #tpu.memory_space<vmem>>, %arg11: memref<1x1xf32, #tpu.memory_space<vmem>>, %arg12: memref<8x1xf32, #tpu.memory_space<vmem>>) attributes {dimension_semantics = [#tpu.dimension_semantics<parallel>], iteration_bounds = array<i64: 1>, scalar_prefetch = 0 : i64, scratch_operands = 0 : i64, tpu.core_type = #tpu.core_type<tc>, window_params = [{transform_indices = @transform_0, window_bounds = array<i64: 8, 16>}, {transform_indices = @transform_1, window_bounds = array<i64: 8, 16>}, {pipeline_mode = #tpu.pipeline_mode<synchronous>, transform_indices = @transform_2, window_bounds = array<i64: 16, 32>}, {pipeline_mode = #tpu.pipeline_mode<synchronous>, transform_indices = @transform_3, window_bounds = array<i64: 16, 32>}, {pipeline_mode = #tpu.pipeline_mode<synchronous>, transform_indices = @transform_4, window_bounds = array<i64: 1, 32>}, {pipeline_mode = #tpu.pipeline_mode<synchronous>, transform_indices = @transform_5, window_bounds = array<i64: 32, 32>}, {pipeline_mode = #tpu.pipeline_mode<synchronous>, transform_indices = @transform_6, window_bounds = array<i64: 1, 32>}, {pipeline_mode = #tpu.pipeline_mode<synchronous>, transform_indices = @transform_7, window_bounds = array<i64: 32, 32>}, {pipeline_mode = #tpu.pipeline_mode<synchronous>, transform_indices = @transform_8, window_bounds = array<i64: 1, 32>}, {pipeline_mode = #tpu.pipeline_mode<synchronous>, transform_indices = @transform_9, window_bounds = array<i64: 1, 32>}, {pipeline_mode = #tpu.pipeline_mode<synchronous>, transform_indices = @transform_10, window_bounds = array<i64: 1, 1>}, {transform_indices = @transform_11, window_bounds = array<i64: 8, 1>}]} {
    %c0 = arith.constant 0 : index
    %c0_0 = arith.constant 0 : index
    %0 = vector.load %arg1[%c0, %c0_0] : memref<8x16xf32, #tpu.memory_space<vmem>>, vector<8x16xf32>
    %c0_1 = arith.constant 0 : index
    %c0_2 = arith.constant 0 : index
    %1 = vector.load %arg3[%c0_1, %c0_2] : memref<16x32xf32, #tpu.memory_space<vmem>>, vector<16x32xf32>
    %cst = arith.constant dense<0.000000e+00> : vector<8x32xf32>
    %2 = tpu.matmul %0, %1, %cst {dimension_numbers = #tpu.dot_dimension_numbers<[1], [0], [0], [1], [0, 0, 1, 1], [], []>} : vector<8x16xf32>, vector<16x32xf32>, vector<8x32xf32> -> vector<8x32xf32>
    %c0_3 = arith.constant 0 : index
    %c0_4 = arith.constant 0 : index
    %3 = vector.load %arg2[%c0_3, %c0_4] : memref<8x16xf32, #tpu.memory_space<vmem>>, vector<8x16xf32>
    %c0_5 = arith.constant 0 : index
    %c0_6 = arith.constant 0 : index
    %4 = vector.load %arg4[%c0_5, %c0_6] : memref<16x32xf32, #tpu.memory_space<vmem>>, vector<16x32xf32>
    %cst_7 = arith.constant dense<0.000000e+00> : vector<8x32xf32>
    %5 = tpu.matmul %3, %4, %cst_7 {dimension_numbers = #tpu.dot_dimension_numbers<[1], [0], [0], [1], [0, 0, 1, 1], [], []>} : vector<8x16xf32>, vector<16x32xf32>, vector<8x32xf32> -> vector<8x32xf32>
    %6 = arith.addf %2, %5 : vector<8x32xf32>
    %c0_8 = arith.constant 0 : index
    %c0_9 = arith.constant 0 : index
    %7 = vector.load %arg5[%c0_8, %c0_9] : memref<1x32xf32, #tpu.memory_space<vmem>>, vector<1x32xf32>
    %8 = vector.broadcast %7 : vector<1x32xf32> to vector<8x32xf32>
    %9 = arith.addf %6, %8 : vector<8x32xf32>
    %cst_10 = arith.constant 0.000000e+00 : f32
    %10 = vector.broadcast %cst_10 : f32 to vector<8x32xf32>
    %11 = arith.maximumf %9, %10 : vector<8x32xf32>
    %c0_11 = arith.constant 0 : index
    %c0_12 = arith.constant 0 : index
    %12 = vector.load %arg6[%c0_11, %c0_12] : memref<32x32xf32, #tpu.memory_space<vmem>>, vector<32x32xf32>
    %cst_13 = arith.constant dense<0.000000e+00> : vector<8x32xf32>
    %13 = tpu.matmul %11, %12, %cst_13 {dimension_numbers = #tpu.dot_dimension_numbers<[1], [0], [0], [1], [0, 0, 1, 1], [], []>} : vector<8x32xf32>, vector<32x32xf32>, vector<8x32xf32> -> vector<8x32xf32>
    %c0_14 = arith.constant 0 : index
    %c0_15 = arith.constant 0 : index
    %14 = vector.load %arg7[%c0_14, %c0_15] : memref<1x32xf32, #tpu.memory_space<vmem>>, vector<1x32xf32>
    %15 = vector.broadcast %14 : vector<1x32xf32> to vector<8x32xf32>
    %16 = arith.addf %13, %15 : vector<8x32xf32>
    %cst_16 = arith.constant 0.000000e+00 : f32
    %17 = vector.broadcast %cst_16 : f32 to vector<8x32xf32>
    %18 = arith.maximumf %16, %17 : vector<8x32xf32>
    %c0_17 = arith.constant 0 : index
    %c0_18 = arith.constant 0 : index
    %19 = vector.load %arg8[%c0_17, %c0_18] : memref<32x32xf32, #tpu.memory_space<vmem>>, vector<32x32xf32>
    %cst_19 = arith.constant dense<0.000000e+00> : vector<8x32xf32>
    %20 = tpu.matmul %18, %19, %cst_19 {dimension_numbers = #tpu.dot_dimension_numbers<[1], [0], [0], [1], [0, 0, 1, 1], [], []>} : vector<8x32xf32>, vector<32x32xf32>, vector<8x32xf32> -> vector<8x32xf32>
    %c0_20 = arith.constant 0 : index
    %c0_21 = arith.constant 0 : index
    %21 = vector.load %arg9[%c0_20, %c0_21] : memref<1x32xf32, #tpu.memory_space<vmem>>, vector<1x32xf32>
    %22 = vector.broadcast %21 : vector<1x32xf32> to vector<8x32xf32>
    %23 = arith.addf %20, %22 : vector<8x32xf32>
    %cst_22 = arith.constant 0.000000e+00 : f32
    %24 = vector.broadcast %cst_22 : f32 to vector<8x32xf32>
    %25 = arith.maximumf %23, %24 : vector<8x32xf32>
    %c0_23 = arith.constant 0 : index
    %c0_24 = arith.constant 0 : index
    %26 = vector.load %arg10[%c0_23, %c0_24] : memref<1x32xf32, #tpu.memory_space<vmem>>, vector<1x32xf32>
    %27 = vector.broadcast %26 : vector<1x32xf32> to vector<8x32xf32>
    %28 = arith.mulf %25, %27 : vector<8x32xf32>
    %cst_25 = arith.constant dense<0.000000e+00> : vector<8xf32>
    %29 = vector.multi_reduction <add>, %28, %cst_25 [1] : vector<8x32xf32> to vector<8xf32>
    %30 = vector.shape_cast %29 : vector<8xf32> to vector<8x1xf32>
    %c0_26 = arith.constant 0 : index
    %c0_27 = arith.constant 0 : index
    %31 = vector.load %arg11[%c0_26, %c0_27] : memref<1x1xf32, #tpu.memory_space<vmem>>, vector<1x1xf32>
    %32 = vector.broadcast %31 : vector<1x1xf32> to vector<8x1xf32>
    %33 = arith.addf %30, %32 : vector<8x1xf32>
    %c0_28 = arith.constant 0 : index
    %c0_29 = arith.constant 0 : index
    %34 = vector.load %arg12[%c0_28, %c0_29] : memref<8x1xf32, #tpu.memory_space<vmem>>, vector<8x1xf32>
    tpu.vector_store %arg12[%c0_28, %c0_29], %33 {strides = array<i32>} : memref<8x1xf32, #tpu.memory_space<vmem>>, vector<8x1xf32>,
    return
  }
  func.func @transform_0(%arg0: i32) -> (i32, i32) {
    %c0_i32 = arith.constant 0 : i32
    %c0_i32_0 = arith.constant 0 : i32
    return %arg0, %c0_i32 : i32, i32
  }
  func.func @transform_1(%arg0: i32) -> (i32, i32) {
    %c0_i32 = arith.constant 0 : i32
    %c0_i32_0 = arith.constant 0 : i32
    return %arg0, %c0_i32 : i32, i32
  }
  func.func @transform_2(%arg0: i32) -> (i32, i32) {
    %c0_i32 = arith.constant 0 : i32
    %c0_i32_0 = arith.constant 0 : i32
    %c0_i32_1 = arith.constant 0 : i32
    return %c0_i32, %c0_i32_0 : i32, i32
  }
  func.func @transform_3(%arg0: i32) -> (i32, i32) {
    %c0_i32 = arith.constant 0 : i32
    %c0_i32_0 = arith.constant 0 : i32
    %c0_i32_1 = arith.constant 0 : i32
    return %c0_i32, %c0_i32_0 : i32, i32
  }
  func.func @transform_4(%arg0: i32) -> (i32, i32) {
    %c0_i32 = arith.constant 0 : i32
    %c0_i32_0 = arith.constant 0 : i32
    %c0_i32_1 = arith.constant 0 : i32
    return %c0_i32, %c0_i32_0 : i32, i32
  }
  func.func @transform_5(%arg0: i32) -> (i32, i32) {
    %c0_i32 = arith.constant 0 : i32
    %c0_i32_0 = arith.constant 0 : i32
    %c0_i32_1 = arith.constant 0 : i32
    return %c0_i32, %c0_i32_0 : i32, i32
  }
  func.func @transform_6(%arg0: i32) -> (i32, i32) {
    %c0_i32 = arith.constant 0 : i32
    %c0_i32_0 = arith.constant 0 : i32
    %c0_i32_1 = arith.constant 0 : i32
    return %c0_i32, %c0_i32_0 : i32, i32
  }
  func.func @transform_7(%arg0: i32) -> (i32, i32) {
    %c0_i32 = arith.constant 0 : i32
    %c0_i32_0 = arith.constant 0 : i32
    %c0_i32_1 = arith.constant 0 : i32
    return %c0_i32, %c0_i32_0 : i32, i32
  }
  func.func @transform_8(%arg0: i32) -> (i32, i32) {
    %c0_i32 = arith.constant 0 : i32
    %c0_i32_0 = arith.constant 0 : i32
    %c0_i32_1 = arith.constant 0 : i32
    return %c0_i32, %c0_i32_0 : i32, i32
  }
  func.func @transform_9(%arg0: i32) -> (i32, i32) {
    %c0_i32 = arith.constant 0 : i32
    %c0_i32_0 = arith.constant 0 : i32
    %c0_i32_1 = arith.constant 0 : i32
    return %c0_i32, %c0_i32_0 : i32, i32
  }
  func.func @transform_10(%arg0: i32) -> (i32, i32) {
    %c0_i32 = arith.constant 0 : i32
    %c0_i32_0 = arith.constant 0 : i32
    %c0_i32_1 = arith.constant 0 : i32
    return %c0_i32, %c0_i32_0 : i32, i32
  }
  func.func @transform_11(%arg0: i32) -> (i32, i32) {
    %c0_i32 = arith.constant 0 : i32
    %c0_i32_0 = arith.constant 0 : i32
    return %arg0, %c0_i32 : i32, i32
  }
}

</mosaic_0001>

<llo_original>
// kernel: tpu_custom_call.1
$region0: #{tpu_custom_call.1}
  #allocation0 [shape = 'u32[]', space=smem, size = 0x4, offset = 0x4, fixed_abs, tag = 'smem constant byte address 0x4 - core index']
  #allocation1 [shape = 'u32[144,128]{1,0:T(1,128)}', space=vmem, size = 0x12000, scoped, tag = 'internal scratch']
  #allocation2 [shape = 'f32[1,1]{1,0:T(1,128)S(1)}', space=vmem, size = 0x200, scoped, tag = 'scoped memory for tpu_custom_call.1']
  %s0 = inlined_call_operand.hbm [shape: f32[8,16], index: 0, kind: input, shape index: {}]
  %s1 = inlined_call_operand.hbm [shape: f32[8,16], index: 1, kind: input, shape index: {}]
  %s2 = inlined_call_operand.hbm [shape: f32[16,32], index: 2, kind: input, shape index: {}]
  %s3 = inlined_call_operand.hbm [shape: f32[16,32], index: 3, kind: input, shape index: {}]
  %s4 = inlined_call_operand.vmem [shape: f32[1,32], index: 4, kind: input, shape index: {}]
  %s5 = inlined_call_operand.hbm [shape: f32[32,32], index: 5, kind: input, shape index: {}]
  %s6 = inlined_call_operand.vmem [shape: f32[1,32], index: 6, kind: input, shape index: {}]
  %s7 = inlined_call_operand.hbm [shape: f32[32,32], index: 7, kind: input, shape index: {}]
  %s8 = inlined_call_operand.vmem [shape: f32[1,32], index: 8, kind: input, shape index: {}]
  %s9 = inlined_call_operand.vmem [shape: f32[1,32], index: 9, kind: input, shape index: {}]
  %s10 = inlined_call_operand.<no memory space> [shape: f32[1,1], index: 10, kind: input, shape index: {}]
  %s11 = inlined_call_operand.vmem [shape: f32[8,1], index: 11, kind: output, shape index: {}]
  %s12 = sld [smem:[#allocation0]]
  $region78: #{tpu_custom_call.1} parent=0
    _
  %s14 = ssub.s32 1, %s12
  %s15 = scalar_select 0, %s14, %s12
  %v16 = vstv %s10
  %17 = vst [vmem:[#allocation2] sm:$0x1] %v16
  $region1: #{tpu_custom_call.1} parent=0
    #allocation3 [shape = 'u8[4096]{0}', space=vmem, size = 0x1000, scoped, tag = 'input window, operand 0, single buffered']
    #allocation4 [shape = 's32[1]{0}', space=sflag, size = 0x4, scoped, tag = 'scoped memory for tpu_custom_call.1']
    #allocation5 [shape = 'u8[4096]{0}', space=vmem, size = 0x1000, scoped, tag = 'input window, operand 1, single buffered']
    #allocation6 [shape = 's32[1]{0}', space=sflag, size = 0x4, scoped, tag = 'scoped memory for tpu_custom_call.1']
    #allocation7 [shape = 'u8[8192]{0}', space=vmem, size = 0x2000, scoped, tag = 'input window, operand 2, single buffered']
    #allocation8 [shape = 'u8[8192]{0}', space=vmem, size = 0x2000, scoped, tag = 'input window, operand 3, single buffered']
    #allocation9 [shape = 's32[1]{0}', space=sflag, size = 0x4, scoped, tag = 'scoped memory for tpu_custom_call.1']
    #allocation10 [shape = 'u8[16384]{0}', space=vmem, size = 0x4000, scoped, tag = 'input window, operand 5, single buffered']
    #allocation11 [shape = 'u8[16384]{0}', space=vmem, size = 0x4000, scoped, tag = 'input window, operand 7, single buffered']
    #allocation12 [shape = 's32[1]{0}', space=sflag, size = 0x4, scoped, tag = 'scoped memory for tpu_custom_call.1']
    %18 = vsyncpa [#allocation4], 0
    %19 = vsyncpa [#allocation6], 0
    %20 = vsyncpa [#allocation9], 0
    %21 = vsyncpa [#allocation12], 0
    // Predicated region
    $region2: #{tpu_custom_call.1} parent=1 // pred_check
      _
    $region3: #{tpu_custom_call.1} parent=1 // pred_check_branch
      %23 = sbr.rel (0) target = $region5
    $region4: #{tpu_custom_call.1} parent=1 // pred_region
      %s25 = ssub.s32 128, 128
      %26 = vsyncadd [#allocation4], %s25
      %s28 = sshll.u32 [#allocation3], 4
      %s29 = int_to_ptr.vmem [resolvable:$true] %s28
      %31 = dma.hbm_to_vmem [thread:$0]  %s0, 128, %s29, [#allocation4]
    $region5: #{tpu_custom_call.1} parent=1 // pred_fallthru
      _
    // Predicated region
    $region6: #{tpu_custom_call.1} parent=1 // pred_check
      _
    $region7: #{tpu_custom_call.1} parent=1 // pred_check_branch
      %33 = sbr.rel (0) target = $region9
    $region8: #{tpu_custom_call.1} parent=1 // pred_region
      %s35 = ssub.s32 128, 128
      %36 = vsyncadd [#allocation6], %s35
      %s38 = sshll.u32 [#allocation5], 4
      %s39 = int_to_ptr.vmem [resolvable:$true] %s38
      %41 = dma.hbm_to_vmem [thread:$0]  %s1, 128, %s39, [#allocation6]
    $region9: #{tpu_custom_call.1} parent=1 // pred_fallthru
      _
    // Predicated region
    $region10: #{tpu_custom_call.1} parent=1 // pred_check
      _
    $region11: #{tpu_custom_call.1} parent=1 // pred_check_branch
      %43 = sbr.rel (0) target = $region13
    $region12: #{tpu_custom_call.1} parent=1 // pred_region
      %s45 = ssub.s32 256, 256
      %46 = vsyncadd [#allocation6], %s45
      %s47 = sshll.u32 [#allocation7], 4
      %s48 = int_to_ptr.vmem [resolvable:$true] %s47
      %53 = dma.hbm_to_vmem [thread:$0]  %s2, 256, %s48, [#allocation6], 128, 128, 8
    $region13: #{tpu_custom_call.1} parent=1 // pred_fallthru
      _
    // Predicated region
    $region14: #{tpu_custom_call.1} parent=1 // pred_check
      _
    $region15: #{tpu_custom_call.1} parent=1 // pred_check_branch
      %55 = sbr.rel (0) target = $region17
    $region16: #{tpu_custom_call.1} parent=1 // pred_region
      %s57 = ssub.s32 256, 256
      %58 = vsyncadd [#allocation9], %s57
      %s59 = sshll.u32 [#allocation8], 4
      %s60 = int_to_ptr.vmem [resolvable:$true] %s59
      %65 = dma.hbm_to_vmem [thread:$0]  %s3, 256, %s60, [#allocation9], 128, 128, 8
    $region17: #{tpu_custom_call.1} parent=1 // pred_fallthru
      _
    // Predicated region
    $region18: #{tpu_custom_call.1} parent=1 // pred_check
      _
    $region19: #{tpu_custom_call.1} parent=1 // pred_check_branch
      %67 = sbr.rel (0) target = $region21
    $region20: #{tpu_custom_call.1} parent=1 // pred_region
      _
    $region21: #{tpu_custom_call.1} parent=1 // pred_fallthru
      _
    // Predicated region
    $region22: #{tpu_custom_call.1} parent=1 // pred_check
      _
    $region23: #{tpu_custom_call.1} parent=1 // pred_check_branch
      %69 = sbr.rel (0) target = $region25
    $region24: #{tpu_custom_call.1} parent=1 // pred_region
      %s71 = ssub.s32 512, 512
      %72 = vsyncadd [#allocation9], %s71
      %s73 = sshll.u32 [#allocation10], 4
      %s74 = int_to_ptr.vmem [resolvable:$true] %s73
      %79 = dma.hbm_to_vmem [thread:$0]  %s5, 512, %s74, [#allocation9], 128, 128, 8
    $region25: #{tpu_custom_call.1} parent=1 // pred_fallthru
      _
    // Predicated region
    $region26: #{tpu_custom_call.1} parent=1 // pred_check
      _
    $region27: #{tpu_custom_call.1} parent=1 // pred_check_branch
      %81 = sbr.rel (0) target = $region29
    $region28: #{tpu_custom_call.1} parent=1 // pred_region
      _
    $region29: #{tpu_custom_call.1} parent=1 // pred_fallthru
      _
    // Predicated region
    $region30: #{tpu_custom_call.1} parent=1 // pred_check
      _
    $region31: #{tpu_custom_call.1} parent=1 // pred_check_branch
      %83 = sbr.rel (0) target = $region33
    $region32: #{tpu_custom_call.1} parent=1 // pred_region
      %s85 = ssub.s32 512, 512
      %86 = vsyncadd [#allocation12], %s85
      %s87 = sshll.u32 [#allocation11], 4
      %s88 = int_to_ptr.vmem [resolvable:$true] %s87
      %93 = dma.hbm_to_vmem [thread:$0]  %s7, 512, %s88, [#allocation12], 128, 128, 8
    $region33: #{tpu_custom_call.1} parent=1 // pred_fallthru
      _
    // Predicated region
    $region34: #{tpu_custom_call.1} parent=1 // pred_check
      _
    $region35: #{tpu_custom_call.1} parent=1 // pred_check_branch
      %95 = sbr.rel (0) target = $region37
    $region36: #{tpu_custom_call.1} parent=1 // pred_region
      _
    $region37: #{tpu_custom_call.1} parent=1 // pred_fallthru
      _
    // Predicated region
    $region38: #{tpu_custom_call.1} parent=1 // pred_check
      _
    $region39: #{tpu_custom_call.1} parent=1 // pred_check_branch
      %97 = sbr.rel (0) target = $region41
    $region40: #{tpu_custom_call.1} parent=1 // pred_region
      _
    $region41: #{tpu_custom_call.1} parent=1 // pred_fallthru
      _
    // Predicated region
    $region42: #{tpu_custom_call.1} parent=1 // pred_check
      _
    $region43: #{tpu_custom_call.1} parent=1 // pred_check_branch
      %99 = sbr.rel (0) target = $region45
    $region44: #{tpu_custom_call.1} parent=1 // pred_region
      _
    $region45: #{tpu_custom_call.1} parent=1 // pred_fallthru
      _
    // Predicated region
    $region46: #{tpu_custom_call.1} parent=1 // pred_check
      _
    $region47: #{tpu_custom_call.1} parent=1 // pred_check_branch
      %101 = sbr.rel (0) target = $region49
    $region48: #{tpu_custom_call.1} parent=1 // pred_region
      %102 = dma.done [#allocation4], 128
    $region49: #{tpu_custom_call.1} parent=1 // pred_fallthru
      _
    // Predicated region
    $region50: #{tpu_custom_call.1} parent=1 // pred_check
      _
    $region51: #{tpu_custom_call.1} parent=1 // pred_check_branch
      %104 = sbr.rel (0) target = $region53
    $region52: #{tpu_custom_call.1} parent=1 // pred_region
      %105 = dma.done [#allocation6], 128
    $region53: #{tpu_custom_call.1} parent=1 // pred_fallthru
      _
    // Predicated region
    $region54: #{tpu_custom_call.1} parent=1 // pred_check
      _
    $region55: #{tpu_custom_call.1} parent=1 // pred_check_branch
      %107 = sbr.rel (0) target = $region57
    $region56: #{tpu_custom_call.1} parent=1 // pred_region
      %108 = dma.done [#allocation6], 256
    $region57: #{tpu_custom_call.1} parent=1 // pred_fallthru
      _
    // Predicated region
    $region58: #{tpu_custom_call.1} parent=1 // pred_check
      _
    $region59: #{tpu_custom_call.1} parent=1 // pred_check_branch
      %110 = sbr.rel (0) target = $region61
    $region60: #{tpu_custom_call.1} parent=1 // pred_region
      %111 = dma.done [#allocation9], 256
    $region61: #{tpu_custom_call.1} parent=1 // pred_fallthru
      _
    // Predicated region
    $region62: #{tpu_custom_call.1} parent=1 // pred_check
      _
    $region63: #{tpu_custom_call.1} parent=1 // pred_check_branch
      %113 = sbr.rel (0) target = $region65
    $region64: #{tpu_custom_call.1} parent=1 // pred_region
      %114 = dma.done [#allocation9], 512
    $region65: #{tpu_custom_call.1} parent=1 // pred_fallthru
      _
    // Predicated region
    $region66: #{tpu_custom_call.1} parent=1 // pred_check
      _
    $region67: #{tpu_custom_call.1} parent=1 // pred_check_branch
      %116 = sbr.rel (0) target = $region69
    $region68: #{tpu_custom_call.1} parent=1 // pred_region
      %117 = dma.done [#allocation12], 512
    $region69: #{tpu_custom_call.1} parent=1 // pred_fallthru
      _
    %v118 = vld [vmem:[#allocation3] sm:$0xff]
    %v119 = vld [vmem:[#allocation7] sm:$0xff]
    %v120 = vld [vmem:[#allocation7 + $0x8] sm:$0xff]
    %v121 = vld [vmem:[#allocation5] sm:$0xff]
    %v122 = vld [vmem:[#allocation8] sm:$0xff]
    %v123 = vld [vmem:[#allocation8 + $0x8] sm:$0xff]
    %vm124 = vcmask 130048
    %v126 = vsel %vm124, %v121, 0
    %128 = vmatprep.subr.mxu0 0.0
    %129 = vmatpush1.msra.mxu0 %v122
    %130 = vmatprep.subr.mxu0 0.0
    %131 = vmatpush1.msra.mxu0 %v123
    %132 = vmatprep.subr.mxu0 0.0
    %133 = vmatpush1.msra.mxu0 0.0
    %134 = vmatprep.subr.mxu0 0.0
    %135 = vmatpush1.msra.mxu0 0.0
    %136 = vmatprep.subr.mxu0 0.0
    %137 = vmatpush1.msra.mxu0 0.0
    %138 = vmatprep.subr.mxu0 0.0
    %139 = vmatpush1.msra.mxu0 0.0
    %140 = vmatprep.subr.mxu0 0.0
    %141 = vmatpush1.msra.mxu0 0.0
    %142 = vmatprep.subr.mxu0 0.0
    %143 = vmatpush1.msra.mxu0 0.0
    %144 = vmatprep.subr.mxu0 0.0
    %145 = vmatpush1.msra.mxu0 0.0
    %146 = vmatprep.subr.mxu0 0.0
    %147 = vmatpush1.msra.mxu0 0.0
    %148 = vmatprep.subr.mxu0 0.0
    %149 = vmatpush1.msra.mxu0 0.0
    %150 = vmatprep.subr.mxu0 0.0
    %151 = vmatpush1.msra.mxu0 0.0
    %152 = vmatprep.subr.mxu0 0.0
    %153 = vmatpush1.msra.mxu0 0.0
    %154 = vmatprep.subr.mxu0 0.0
    %155 = vmatpush1.msra.mxu0 0.0
    %156 = vmatprep.subr.mxu0 0.0
    %157 = vmatpush1.msra.mxu0 0.0
    %158 = vmatprep.subr.mxu0 0.0
    %159 = vmatpush1.msra.mxu0 0.0
    %160 = vmatprep.subr.mxu0 0.0
    %161 = vmatpush1.msra.mxu0 0.0
    %162 = vmatprep.subr.mxu0 0.0
    %163 = vmatpush1.msra.mxu0 0.0
    %164 = vmatprep.subr.mxu0 0.0
    %165 = vmatpush1.msra.mxu0 0.0
    %166 = vmatprep.subr.mxu0 0.0
    %167 = vmatpush1.msra.mxu0 0.0
    %168 = vmatprep.subr.mxu0 0.0
    %169 = vmatpush1.msra.mxu0 0.0
    %170 = vmatprep.subr.mxu0 0.0
    %171 = vmatpush1.msra.mxu0 0.0
    %172 = vmatprep.subr.mxu0 0.0
    %173 = vmatpush1.msra.mxu0 0.0
    %174 = vmatprep.subr.mxu0 0.0
    %175 = vmatpush1.msra.mxu0 0.0
    %176 = vmatprep.subr.mxu0 0.0
    %177 = vmatpush1.msra.mxu0 0.0
    %178 = vmatprep.subr.mxu0 0.0
    %179 = vmatpush1.msra.mxu0 0.0
    %180 = vmatprep.subr.mxu0 0.0
    %181 = vmatpush1.msra.mxu0 0.0
    %182 = vmatprep.subr.mxu0 0.0
    %183 = vmatpush1.msra.mxu0 0.0
    %184 = vmatprep.subr.mxu0 0.0
    %185 = vmatpush1.msra.mxu0 0.0
    %186 = vmatprep.subr.mxu0 0.0
    %187 = vmatpush1.msra.mxu0 0.0
    %188 = vmatprep.subr.mxu0 0.0
    %189 = vmatpush1.msra.mxu0 0.0
    %190 = vmatprep.subr.mxu0 0.0
    %191 = vmatpush1.msra.mxu0 0.0
    %192 = vmatprep.mubr.f32.mxu0 0.0
    %193 = vmatmul.mubr.f32.gmra.mrb[0].mxu0 %v126
    %v194 = vpop.f32.mrb[0].mxu0
    %v195 = vadd.f32 0.0, %v194
    %v196 = vpop.f32.mrb[0].mxu0
    %197 = vdwg.mxu0
    %v199 = vsel %vm124, %v118, 0
    %201 = vmatprep.subr.mxu0 0.0
    %202 = vmatpush1.msra.mxu0 %v119
    %203 = vmatprep.subr.mxu0 0.0
    %204 = vmatpush1.msra.mxu0 %v120
    %205 = vmatprep.subr.mxu0 0.0
    %206 = vmatpush1.msra.mxu0 0.0
    %207 = vmatprep.subr.mxu0 0.0
    %208 = vmatpush1.msra.mxu0 0.0
    %209 = vmatprep.subr.mxu0 0.0
    %210 = vmatpush1.msra.mxu0 0.0
    %211 = vmatprep.subr.mxu0 0.0
    %212 = vmatpush1.msra.mxu0 0.0
    %213 = vmatprep.subr.mxu0 0.0
    %214 = vmatpush1.msra.mxu0 0.0
    %215 = vmatprep.subr.mxu0 0.0
    %216 = vmatpush1.msra.mxu0 0.0
    %217 = vmatprep.subr.mxu0 0.0
    %218 = vmatpush1.msra.mxu0 0.0
    %219 = vmatprep.subr.mxu0 0.0
    %220 = vmatpush1.msra.mxu0 0.0
    %221 = vmatprep.subr.mxu0 0.0
    %222 = vmatpush1.msra.mxu0 0.0
    %223 = vmatprep.subr.mxu0 0.0
    %224 = vmatpush1.msra.mxu0 0.0
    %225 = vmatprep.subr.mxu0 0.0
    %226 = vmatpush1.msra.mxu0 0.0
    %227 = vmatprep.subr.mxu0 0.0
    %228 = vmatpush1.msra.mxu0 0.0
    %229 = vmatprep.subr.mxu0 0.0
    %230 = vmatpush1.msra.mxu0 0.0
    %231 = vmatprep.subr.mxu0 0.0
    %232 = vmatpush1.msra.mxu0 0.0
    %233 = vmatprep.subr.mxu0 0.0
    %234 = vmatpush1.msra.mxu0 0.0
    %235 = vmatprep.subr.mxu0 0.0
    %236 = vmatpush1.msra.mxu0 0.0
    %237 = vmatprep.subr.mxu0 0.0
    %238 = vmatpush1.msra.mxu0 0.0
    %239 = vmatprep.subr.mxu0 0.0
    %240 = vmatpush1.msra.mxu0 0.0
    %241 = vmatprep.subr.mxu0 0.0
    %242 = vmatpush1.msra.mxu0 0.0
    %243 = vmatprep.subr.mxu0 0.0
    %244 = vmatpush1.msra.mxu0 0.0
    %245 = vmatprep.subr.mxu0 0.0
    %246 = vmatpush1.msra.mxu0 0.0
    %247 = vmatprep.subr.mxu0 0.0
    %248 = vmatpush1.msra.mxu0 0.0
    %249 = vmatprep.subr.mxu0 0.0
    %250 = vmatpush1.msra.mxu0 0.0
    %251 = vmatprep.subr.mxu0 0.0
    %252 = vmatpush1.msra.mxu0 0.0
    %253 = vmatprep.subr.mxu0 0.0
    %254 = vmatpush1.msra.mxu0 0.0
    %255 = vmatprep.subr.mxu0 0.0
    %256 = vmatpush1.msra.mxu0 0.0
    %257 = vmatprep.subr.mxu0 0.0
    %258 = vmatpush1.msra.mxu0 0.0
    %259 = vmatprep.subr.mxu0 0.0
    %260 = vmatpush1.msra.mxu0 0.0
    %261 = vmatprep.subr.mxu0 0.0
    %262 = vmatpush1.msra.mxu0 0.0
    %263 = vmatprep.subr.mxu0 0.0
    %264 = vmatpush1.msra.mxu0 0.0
    %265 = vmatprep.mubr.f32.mxu0 0.0
    %266 = vmatmul.mubr.f32.gmra.mrb[0].mxu0 %v199
    %v267 = vpop.f32.mrb[0].mxu0
    %v268 = vadd.f32 %v195, %v267
    %v269 = vpop.f32.mrb[0].mxu0
    %270 = vdwg.mxu0
    %v271 = vld [vmem:[%s4] sm:$0x1]
    %v273 = vlaneseq
    %v274 = vshrl.u32 %v273, 7
    %v275 = vsub.s32 0, %v274
    %v276 = vrot.slane %v271, %v275
    %v278 = vadd.f32 %v268, %v276
    %v279 = vmax.f32 %v278, 0.0
    %v280 = vld [vmem:[#allocation10] sm:$0xff]
    %v281 = vld [vmem:[#allocation10 + $0x8] sm:$0xff]
    %v282 = vld [vmem:[#allocation10 + $0x10] sm:$0xff]
    %v283 = vld [vmem:[#allocation10 + $0x18] sm:$0xff]
    %v284 = vld [vmem:[%s6] sm:$0x1]
    %v286 = vlaneseq
    %v287 = vshrl.u32 %v286, 7
    %v288 = vsub.s32 0, %v287
    %v289 = vrot.slane %v284, %v288
    %vm291 = vcmask 261120
    %v293 = vsel %vm291, %v279, 0
    %295 = vmatprep.subr.mxu0 0.0
    %296 = vmatpush1.msra.mxu0 %v280
    %297 = vmatprep.subr.mxu0 0.0
    %298 = vmatpush1.msra.mxu0 %v281
    %299 = vmatprep.subr.mxu0 0.0
    %300 = vmatpush1.msra.mxu0 %v282
    %301 = vmatprep.subr.mxu0 0.0
    %302 = vmatpush1.msra.mxu0 %v283
    %303 = vmatprep.subr.mxu0 0.0
    %304 = vmatpush1.msra.mxu0 0.0
    %305 = vmatprep.subr.mxu0 0.0
    %306 = vmatpush1.msra.mxu0 0.0
    %307 = vmatprep.subr.mxu0 0.0
    %308 = vmatpush1.msra.mxu0 0.0
    %309 = vmatprep.subr.mxu0 0.0
    %310 = vmatpush1.msra.mxu0 0.0
    %311 = vmatprep.subr.mxu0 0.0
    %312 = vmatpush1.msra.mxu0 0.0
    %313 = vmatprep.subr.mxu0 0.0
    %314 = vmatpush1.msra.mxu0 0.0
    %315 = vmatprep.subr.mxu0 0.0
    %316 = vmatpush1.msra.mxu0 0.0
    %317 = vmatprep.subr.mxu0 0.0
    %318 = vmatpush1.msra.mxu0 0.0
    %319 = vmatprep.subr.mxu0 0.0
    %320 = vmatpush1.msra.mxu0 0.0
    %321 = vmatprep.subr.mxu0 0.0
    %322 = vmatpush1.msra.mxu0 0.0
    %323 = vmatprep.subr.mxu0 0.0
    %324 = vmatpush1.msra.mxu0 0.0
    %325 = vmatprep.subr.mxu0 0.0
    %326 = vmatpush1.msra.mxu0 0.0
    %327 = vmatprep.subr.mxu0 0.0
    %328 = vmatpush1.msra.mxu0 0.0
    %329 = vmatprep.subr.mxu0 0.0
    %330 = vmatpush1.msra.mxu0 0.0
    %331 = vmatprep.subr.mxu0 0.0
    %332 = vmatpush1.msra.mxu0 0.0
    %333 = vmatprep.subr.mxu0 0.0
    %334 = vmatpush1.msra.mxu0 0.0
    %335 = vmatprep.subr.mxu0 0.0
    %336 = vmatpush1.msra.mxu0 0.0
    %337 = vmatprep.subr.mxu0 0.0
    %338 = vmatpush1.msra.mxu0 0.0
    %339 = vmatprep.subr.mxu0 0.0
    %340 = vmatpush1.msra.mxu0 0.0
    %341 = vmatprep.subr.mxu0 0.0
    %342 = vmatpush1.msra.mxu0 0.0
    %343 = vmatprep.subr.mxu0 0.0
    %344 = vmatpush1.msra.mxu0 0.0
    %345 = vmatprep.subr.mxu0 0.0
    %346 = vmatpush1.msra.mxu0 0.0
    %347 = vmatprep.subr.mxu0 0.0
    %348 = vmatpush1.msra.mxu0 0.0
    %349 = vmatprep.subr.mxu0 0.0
    %350 = vmatpush1.msra.mxu0 0.0
    %351 = vmatprep.subr.mxu0 0.0
    %352 = vmatpush1.msra.mxu0 0.0
    %353 = vmatprep.subr.mxu0 0.0
    %354 = vmatpush1.msra.mxu0 0.0
    %355 = vmatprep.subr.mxu0 0.0
    %356 = vmatpush1.msra.mxu0 0.0
    %357 = vmatprep.subr.mxu0 0.0
    %358 = vmatpush1.msra.mxu0 0.0
    %359 = vmatprep.mubr.f32.mxu0 0.0
    %360 = vmatmul.mubr.f32.gmra.mrb[0].mxu0 %v293
    %v361 = vpop.f32.mrb[0].mxu0
    %v362 = vadd.f32 %v289, %v361
    %v363 = vpop.f32.mrb[0].mxu0
    %364 = vdwg.mxu0
    %v365 = vmax.f32 %v362, 0.0
    %v366 = vld [vmem:[#allocation11] sm:$0xff]
    %v367 = vld [vmem:[#allocation11 + $0x8] sm:$0xff]
    %v368 = vld [vmem:[#allocation11 + $0x10] sm:$0xff]
    %v369 = vld [vmem:[#allocation11 + $0x18] sm:$0xff]
    %v370 = vld [vmem:[%s8] sm:$0x1]
    %v372 = vlaneseq
    %v373 = vshrl.u32 %v372, 7
    %v374 = vsub.s32 0, %v373
    %v375 = vrot.slane %v370, %v374
    %v378 = vsel %vm291, %v365, 0
    %380 = vmatprep.subr.mxu0 0.0
    %381 = vmatpush1.msra.mxu0 %v366
    %382 = vmatprep.subr.mxu0 0.0
    %383 = vmatpush1.msra.mxu0 %v367
    %384 = vmatprep.subr.mxu0 0.0
    %385 = vmatpush1.msra.mxu0 %v368
    %386 = vmatprep.subr.mxu0 0.0
    %387 = vmatpush1.msra.mxu0 %v369
    %388 = vmatprep.subr.mxu0 0.0
    %389 = vmatpush1.msra.mxu0 0.0
    %390 = vmatprep.subr.mxu0 0.0
    %391 = vmatpush1.msra.mxu0 0.0
    %392 = vmatprep.subr.mxu0 0.0
    %393 = vmatpush1.msra.mxu0 0.0
    %394 = vmatprep.subr.mxu0 0.0
    %395 = vmatpush1.msra.mxu0 0.0
    %396 = vmatprep.subr.mxu0 0.0
    %397 = vmatpush1.msra.mxu0 0.0
    %398 = vmatprep.subr.mxu0 0.0
    %399 = vmatpush1.msra.mxu0 0.0
    %400 = vmatprep.subr.mxu0 0.0
    %401 = vmatpush1.msra.mxu0 0.0
    %402 = vmatprep.subr.mxu0 0.0
    %403 = vmatpush1.msra.mxu0 0.0
    %404 = vmatprep.subr.mxu0 0.0
    %405 = vmatpush1.msra.mxu0 0.0
    %406 = vmatprep.subr.mxu0 0.0
    %407 = vmatpush1.msra.mxu0 0.0
    %408 = vmatprep.subr.mxu0 0.0
    %409 = vmatpush1.msra.mxu0 0.0
    %410 = vmatprep.subr.mxu0 0.0
    %411 = vmatpush1.msra.mxu0 0.0
    %412 = vmatprep.subr.mxu0 0.0
    %413 = vmatpush1.msra.mxu0 0.0
    %414 = vmatprep.subr.mxu0 0.0
    %415 = vmatpush1.msra.mxu0 0.0
    %416 = vmatprep.subr.mxu0 0.0
    %417 = vmatpush1.msra.mxu0 0.0
    %418 = vmatprep.subr.mxu0 0.0
    %419 = vmatpush1.msra.mxu0 0.0
    %420 = vmatprep.subr.mxu0 0.0
    %421 = vmatpush1.msra.mxu0 0.0
    %422 = vmatprep.subr.mxu0 0.0
    %423 = vmatpush1.msra.mxu0 0.0
    %424 = vmatprep.subr.mxu0 0.0
    %425 = vmatpush1.msra.mxu0 0.0
    %426 = vmatprep.subr.mxu0 0.0
    %427 = vmatpush1.msra.mxu0 0.0
    %428 = vmatprep.subr.mxu0 0.0
    %429 = vmatpush1.msra.mxu0 0.0
    %430 = vmatprep.subr.mxu0 0.0
    %431 = vmatpush1.msra.mxu0 0.0
    %432 = vmatprep.subr.mxu0 0.0
    %433 = vmatpush1.msra.mxu0 0.0
    %434 = vmatprep.subr.mxu0 0.0
    %435 = vmatpush1.msra.mxu0 0.0
    %436 = vmatprep.subr.mxu0 0.0
    %437 = vmatpush1.msra.mxu0 0.0
    %438 = vmatprep.subr.mxu0 0.0
    %439 = vmatpush1.msra.mxu0 0.0
    %440 = vmatprep.subr.mxu0 0.0
    %441 = vmatpush1.msra.mxu0 0.0
    %442 = vmatprep.subr.mxu0 0.0
    %443 = vmatpush1.msra.mxu0 0.0
    %444 = vmatprep.mubr.f32.mxu0 0.0
    %445 = vmatmul.mubr.f32.gmra.mrb[0].mxu0 %v378
    %v446 = vpop.f32.mrb[0].mxu0
    %v447 = vadd.f32 %v375, %v446
    %v448 = vpop.f32.mrb[0].mxu0
    %449 = vdwg.mxu0
    %v450 = vmax.f32 %v447, 0.0
    %v451 = vld [vmem:[%s9] sm:$0x1]
    %v453 = vlaneseq
    %v454 = vshrl.u32 %v453, 7
    %v455 = vsub.s32 0, %v454
    %v456 = vrot.slane %v451, %v455
    %v458 = vmul.f32 %v450, %v456
    %v459 = vsel %vm291, %v458, 0.0
    %460 = vadd.xlane.f32.xlu0 %v459
    %v461 = vpop.xlane.xlu0 %460
    %v462 = vld [vmem:[#allocation2] sm:$0x1]
    %v464 = vlaneseq
    %v465 = vshrl.u32 %v464, 7
    %v466 = vsub.s32 0, %v465
    %v467 = vrot.slane %v462, %v466
    %v469 = vadd.f32 %v461, %v467
    %vm470 = vcmask 7168
    %471 = vst.msk [vmem:[%s11] sm:$0xff] %vm470, %v469
    // Predicated region
    $region70: #{tpu_custom_call.1} parent=1 // pred_check
      _
    $region71: #{tpu_custom_call.1} parent=1 // pred_check_branch
      %473 = sbr.rel (0) target = $region73
    $region72: #{tpu_custom_call.1} parent=1 // pred_region
      _
    $region73: #{tpu_custom_call.1} parent=1 // pred_fallthru
      _
    // Predicated region
    $region74: #{tpu_custom_call.1} parent=1 // pred_check
      _
    $region75: #{tpu_custom_call.1} parent=1 // pred_check_branch
      %475 = sbr.rel (0) target = $region77
    $region76: #{tpu_custom_call.1} parent=1 // pred_region
      _
    $region77: #{tpu_custom_call.1} parent=1 // pred_fallthru
      _
    %476 = vsyncpa [#allocation4], 1
    %477 = vsyncpa [#allocation6], 1
    %478 = vsyncpa [#allocation9], 1
    %479 = vsyncpa [#allocation12], 1

</llo_original>
